<compile_context>
chip_gen: v5e
topology: v5e:2x2
jax: 0.10.0
libtpu: 0.0.40
codegen_flags: <defaults>
</compile_context>

<pallas_src>
import functools

import jax
import jax.numpy as jnp
from jax.experimental import pallas as pl
from jax.experimental.pallas import tpu as pltpu

LANE = 128


def _round_up(n: int, m: int) -> int:
    return ((n + m - 1) // m) * m


def _make_mlp_kernel(num_linear_layers: int):
    """Fused MLP kernel. Ref order: (x, w0, b0, ..., w_{L-1}, b_{L-1}, out).

    Semantics (matches the PyTorch forward):
        h = x @ w0 + b0
        for i in 1..L-1:  h = relu(h); h = h @ wi + bi
        out = softmax(h, axis=1)
    """

    def kernel(*refs):
        x_ref = refs[0]
        o_ref = refs[-1]
        p = refs[1:-1]

        h = x_ref[...]
        for li in range(num_linear_layers):
            w = p[2 * li][...]
            b = p[2 * li + 1][...]
            if li > 0:
                h = jnp.maximum(h, 0.0)  # nn.ReLU before every hidden/output linear
            h = jnp.dot(h, w, preferred_element_type=jnp.float32) + b

        # nn.Softmax(dim=1) over the (unpadded) class axis; exact normalization.
        m = jnp.max(h, axis=-1, keepdims=True)
        e = jnp.exp(h - m)
        denom = jnp.sum(e, axis=-1, keepdims=True)
        o_ref[...] = (e / denom).astype(o_ref.dtype)

    return kernel


def _pad_params(params):
    """Zero-pad HIDDEN widths (and matching input dims of later layers) to lane width (128).
    The final layer keeps its real output width (num_classes) so the output store is not
    inflated. Zero padding keeps results exact: padded hidden columns are 0, ReLU(0)=0,
    and the corresponding padded weight rows of the next layer are 0."""
    padded = []
    num_layers = len(params)
    for li, (w, b) in enumerate(params):
        in_dim, out_dim = w.shape
        in_pad = in_dim if li == 0 else _round_up(in_dim, LANE)
        out_pad = out_dim if li == num_layers - 1 else _round_up(out_dim, LANE)
        w_p = jnp.zeros((in_pad, out_pad), w.dtype).at[:in_dim, :out_dim].set(w)
        b_p = jnp.zeros((1, out_pad), b.dtype).at[:, :out_dim].set(b)
        padded.append((w_p, b_p))
    return padded


@functools.partial(jax.jit, static_argnames=("tile_m",))
def mlp_forward(x, params, *, tile_m: int = 1024):
    """params: list of (w, b) with w:(in,out), b:(1,out). Runs the fused Pallas kernel.

    x: (B, 6) f32. Returns (B, num_classes) softmax probabilities (f32)."""
    num_layers = len(params)
    num_classes = params[-1][0].shape[1]
    in_dim = x.shape[1]
    B = x.shape[0]

    padded = _pad_params(params)

    # Batch tile: multiple of 8 sublanes; small batches run in a single grid step.
    tm = min(tile_m, _round_up(B, 8))
    tm = _round_up(tm, 8)
    b_pad = _round_up(B, tm)
    if b_pad != B:
        x = jnp.pad(x, ((0, b_pad - B), (0, 0)))

    flat = []
    for w, b in padded:
        flat.extend([w, b])

    in_specs = [pl.BlockSpec((tm, in_dim), lambda i: (i, 0))]
    for w, b in padded:
        # Constant index_map -> weights/biases stay VMEM-resident across grid steps.
        in_specs.append(pl.BlockSpec(w.shape, lambda i: (0, 0)))
        in_specs.append(pl.BlockSpec(b.shape, lambda i: (0, 0)))

    kernel = _make_mlp_kernel(num_layers)

    flops = 2 * b_pad * sum(int(w.shape[0]) * int(w.shape[1]) for w, _ in padded)
    bytes_accessed = 4 * (
        b_pad * in_dim
        + b_pad * num_classes
        + sum(int(w.size) + int(b.size) for w, b in padded)
    )
    cost = pl.CostEstimate(
        flops=flops,
        transcendentals=b_pad * num_classes,
        bytes_accessed=bytes_accessed,
    )

    out = pl.pallas_call(
        kernel,
        out_shape=jax.ShapeDtypeStruct((b_pad, num_classes), jnp.float32),
        grid=(b_pad // tm,),
        in_specs=in_specs,
        out_specs=pl.BlockSpec((tm, num_classes), lambda i: (i, 0)),
        compiler_params=pltpu.CompilerParams(
            dimension_semantics=("parallel",),  # shard batch tiles across TCs (v7x)
        ),
        cost_estimate=cost,
    )(x, *flat)

    return out[:B]


def init_params(key, layer_dims):
    """Deterministic init mimicking nn.Linear shapes: (in_dim, out_dim) weights, (1, out_dim) bias."""
    params = []
    for in_dim, out_dim in zip(layer_dims[:-1], layer_dims[1:]):
        key, kw, kb = jax.random.split(key, 3)
        bound = 1.0 / jnp.sqrt(in_dim)
        w = jax.random.uniform(kw, (in_dim, out_dim), jnp.float32, -bound, bound)
        b = jax.random.uniform(kb, (1, out_dim), jnp.float32, -bound, bound)
        params.append((w, b))
    return params


def mlp_reference(x, params):
    """Plain-JAX reference of the PyTorch forward, for a correctness check."""
    h = x
    for li, (w, b) in enumerate(params):
        if li > 0:
            h = jnp.maximum(h, 0.0)
        h = h @ w + b
    return jax.nn.softmax(h, axis=1)


if __name__ == "__main__":
    # hyperparams = {'mlp': {'hidden_layers': [32, 32]}, 'num_classes': 4}
    hidden_layers = [32, 32]
    num_classes = 4
    in_features = 6
    batch = 40          # not a multiple of the tile -> exercises pad/slice path
    tile_m = 16         # small tile here only to exercise a multi-step (parallel) grid

    layer_dims = [in_features] + hidden_layers + [num_classes]

    key = jax.random.PRNGKey(0)
    key, kx = jax.random.split(key)
    x = jax.random.normal(kx, (batch, in_features), dtype=jnp.float32)
    params = init_params(key, layer_dims)

    out = mlp_forward(x, params, tile_m=tile_m)
    out = jax.block_until_ready(out)

    ref = mlp_reference(x, params)
    assert out.shape == (batch, num_classes)
    # rows of a softmax sum to 1 (exact normalization in-kernel)
    assert jnp.allclose(jnp.sum(out, axis=1), 1.0, atol=1e-5)
    assert jnp.allclose(out, ref, atol=1e-5, rtol=1e-5)

    # Also exercise the single-grid-step (default tile) path.
    out2 = jax.block_until_ready(mlp_forward(x, params))
    assert jnp.allclose(out2, ref, atol=1e-5, rtol=1e-5)

    print("KERNEL_OK")
</pallas_src>

<mosaic_0001>
module attributes {stable_mosaic.version = 11 : i64} {
  func.func @kernel(%arg0: i32, %arg1: memref<16x6xf32, #tpu.memory_space<vmem>>, %arg2: memref<6x128xf32, #tpu.memory_space<vmem>>, %arg3: memref<1x128xf32, #tpu.memory_space<vmem>>, %arg4: memref<128x128xf32, #tpu.memory_space<vmem>>, %arg5: memref<1x128xf32, #tpu.memory_space<vmem>>, %arg6: memref<128x4xf32, #tpu.memory_space<vmem>>, %arg7: memref<1x4xf32, #tpu.memory_space<vmem>>, %arg8: memref<16x4xf32, #tpu.memory_space<vmem>>) attributes {dimension_semantics = [#tpu.dimension_semantics<parallel>], iteration_bounds = array<i64: 3>, scalar_prefetch = 0 : i64, scratch_operands = 0 : i64, tpu.core_type = #tpu.core_type<tc>, window_params = [{transform_indices = @transform_0, window_bounds = array<i64: 16, 6>}, {pipeline_mode = #tpu.pipeline_mode<synchronous>, transform_indices = @transform_1, window_bounds = array<i64: 6, 128>}, {pipeline_mode = #tpu.pipeline_mode<synchronous>, transform_indices = @transform_2, window_bounds = array<i64: 1, 128>}, {pipeline_mode = #tpu.pipeline_mode<synchronous>, transform_indices = @transform_3, window_bounds = array<i64: 128, 128>}, {pipeline_mode = #tpu.pipeline_mode<synchronous>, transform_indices = @transform_4, window_bounds = array<i64: 1, 128>}, {pipeline_mode = #tpu.pipeline_mode<synchronous>, transform_indices = @transform_5, window_bounds = array<i64: 128, 4>}, {pipeline_mode = #tpu.pipeline_mode<synchronous>, transform_indices = @transform_6, window_bounds = array<i64: 1, 4>}, {transform_indices = @transform_7, window_bounds = array<i64: 16, 4>}]} {
    %c0 = arith.constant 0 : index
    %c0_0 = arith.constant 0 : index
    %0 = vector.load %arg1[%c0, %c0_0] : memref<16x6xf32, #tpu.memory_space<vmem>>, vector<16x6xf32>
    %c0_1 = arith.constant 0 : index
    %c0_2 = arith.constant 0 : index
    %1 = vector.load %arg2[%c0_1, %c0_2] : memref<6x128xf32, #tpu.memory_space<vmem>>, vector<6x128xf32>
    %c0_3 = arith.constant 0 : index
    %c0_4 = arith.constant 0 : index
    %2 = vector.load %arg3[%c0_3, %c0_4] : memref<1x128xf32, #tpu.memory_space<vmem>>, vector<1x128xf32>
    %cst = arith.constant dense<0.000000e+00> : vector<16x128xf32>
    %3 = tpu.matmul %0, %1, %cst {dimension_numbers = #tpu.dot_dimension_numbers<[1], [0], [0], [1], [0, 0, 1, 1], [], []>} : vector<16x6xf32>, vector<6x128xf32>, vector<16x128xf32> -> vector<16x128xf32>
    %4 = vector.broadcast %2 : vector<1x128xf32> to vector<16x128xf32>
    %5 = arith.addf %3, %4 : vector<16x128xf32>
    %c0_5 = arith.constant 0 : index
    %c0_6 = arith.constant 0 : index
    %6 = vector.load %arg4[%c0_5, %c0_6] : memref<128x128xf32, #tpu.memory_space<vmem>>, vector<128x128xf32>
    %c0_7 = arith.constant 0 : index
    %c0_8 = arith.constant 0 : index
    %7 = vector.load %arg5[%c0_7, %c0_8] : memref<1x128xf32, #tpu.memory_space<vmem>>, vector<1x128xf32>
    %cst_9 = arith.constant 0.000000e+00 : f32
    %8 = vector.broadcast %cst_9 : f32 to vector<16x128xf32>
    %9 = arith.maximumf %5, %8 : vector<16x128xf32>
    %cst_10 = arith.constant dense<0.000000e+00> : vector<16x128xf32>
    %10 = tpu.matmul %9, %6, %cst_10 {dimension_numbers = #tpu.dot_dimension_numbers<[1], [0], [0], [1], [0, 0, 1, 1], [], []>} : vector<16x128xf32>, vector<128x128xf32>, vector<16x128xf32> -> vector<16x128xf32>
    %11 = vector.broadcast %7 : vector<1x128xf32> to vector<16x128xf32>
    %12 = arith.addf %10, %11 : vector<16x128xf32>
    %c0_11 = arith.constant 0 : index
    %c0_12 = arith.constant 0 : index
    %13 = vector.load %arg6[%c0_11, %c0_12] : memref<128x4xf32, #tpu.memory_space<vmem>>, vector<128x4xf32>
    %c0_13 = arith.constant 0 : index
    %c0_14 = arith.constant 0 : index
    %14 = vector.load %arg7[%c0_13, %c0_14] : memref<1x4xf32, #tpu.memory_space<vmem>>, vector<1x4xf32>
    %cst_15 = arith.constant 0.000000e+00 : f32
    %15 = vector.broadcast %cst_15 : f32 to vector<16x128xf32>
    %16 = arith.maximumf %12, %15 : vector<16x128xf32>
    %cst_16 = arith.constant dense<0.000000e+00> : vector<16x4xf32>
    %17 = tpu.matmul %16, %13, %cst_16 {dimension_numbers = #tpu.dot_dimension_numbers<[1], [0], [0], [1], [0, 0, 1, 1], [], []>} : vector<16x128xf32>, vector<128x4xf32>, vector<16x4xf32> -> vector<16x4xf32>
    %18 = vector.broadcast %14 : vector<1x4xf32> to vector<16x4xf32>
    %19 = arith.addf %17, %18 : vector<16x4xf32>
    %cst_17 = arith.constant dense<0xFF800000> : vector<16xf32>
    %20 = vector.multi_reduction <maximumf>, %19, %cst_17 [1] : vector<16x4xf32> to vector<16xf32>
    %21 = vector.shape_cast %20 : vector<16xf32> to vector<16x1xf32>
    %22 = vector.broadcast %21 : vector<16x1xf32> to vector<16x4xf32>
    %23 = arith.subf %19, %22 : vector<16x4xf32>
    %24 = math.exp %23 : vector<16x4xf32>
    %cst_18 = arith.constant dense<0.000000e+00> : vector<16xf32>
    %25 = vector.multi_reduction <add>, %24, %cst_18 [1] : vector<16x4xf32> to vector<16xf32>
    %26 = vector.shape_cast %25 : vector<16xf32> to vector<16x1xf32>
    %27 = vector.broadcast %26 : vector<16x1xf32> to vector<16x4xf32>
    %28 = arith.divf %24, %27 : vector<16x4xf32>
    %c0_19 = arith.constant 0 : index
    %c0_20 = arith.constant 0 : index
    %29 = vector.load %arg8[%c0_19, %c0_20] : memref<16x4xf32, #tpu.memory_space<vmem>>, vector<16x4xf32>
    tpu.vector_store %arg8[%c0_19, %c0_20], %28 {strides = array<i32>} : memref<16x4xf32, #tpu.memory_space<vmem>>, vector<16x4xf32>,
    return
  }
  func.func @transform_0(%arg0: i32) -> (i32, i32) {
    %c0_i32 = arith.constant 0 : i32
    %c0_i32_0 = arith.constant 0 : i32
    return %arg0, %c0_i32 : i32, i32
  }
  func.func @transform_1(%arg0: i32) -> (i32, i32) {
    %c0_i32 = arith.constant 0 : i32
    %c0_i32_0 = arith.constant 0 : i32
    %c0_i32_1 = arith.constant 0 : i32
    return %c0_i32, %c0_i32_0 : i32, i32
  }
  func.func @transform_2(%arg0: i32) -> (i32, i32) {
    %c0_i32 = arith.constant 0 : i32
    %c0_i32_0 = arith.constant 0 : i32
    %c0_i32_1 = arith.constant 0 : i32
    return %c0_i32, %c0_i32_0 : i32, i32
  }
  func.func @transform_3(%arg0: i32) -> (i32, i32) {
    %c0_i32 = arith.constant 0 : i32
    %c0_i32_0 = arith.constant 0 : i32
    %c0_i32_1 = arith.constant 0 : i32
    return %c0_i32, %c0_i32_0 : i32, i32
  }
  func.func @transform_4(%arg0: i32) -> (i32, i32) {
    %c0_i32 = arith.constant 0 : i32
    %c0_i32_0 = arith.constant 0 : i32
    %c0_i32_1 = arith.constant 0 : i32
    return %c0_i32, %c0_i32_0 : i32, i32
  }
  func.func @transform_5(%arg0: i32) -> (i32, i32) {
    %c0_i32 = arith.constant 0 : i32
    %c0_i32_0 = arith.constant 0 : i32
    %c0_i32_1 = arith.constant 0 : i32
    return %c0_i32, %c0_i32_0 : i32, i32
  }
  func.func @transform_6(%arg0: i32) -> (i32, i32) {
    %c0_i32 = arith.constant 0 : i32
    %c0_i32_0 = arith.constant 0 : i32
    %c0_i32_1 = arith.constant 0 : i32
    return %c0_i32, %c0_i32_0 : i32, i32
  }
  func.func @transform_7(%arg0: i32) -> (i32, i32) {
    %c0_i32 = arith.constant 0 : i32
    %c0_i32_0 = arith.constant 0 : i32
    return %arg0, %c0_i32 : i32, i32
  }
}

</mosaic_0001>

<llo_original>
// kernel: mlp_forward.1
$region0: #{mlp_forward.1}
  #allocation0 [shape = 'u32[]', space=smem, size = 0x4, offset = 0x4, fixed_abs, tag = 'smem constant byte address 0x4 - core index']
  #allocation1 [shape = 'u32[72,128]{1,0:T(1,128)}', space=vmem, size = 0x9000, scoped, tag = 'internal scratch']
  %s0 = inlined_call_operand.vmem [shape: f32[48,6], index: 0, kind: input, shape index: {}]
  %s1 = inlined_call_operand.vmem [shape: f32[6,128], index: 1, kind: input, shape index: {}]
  %s2 = inlined_call_operand.vmem [shape: f32[1,128], index: 2, kind: input, shape index: {}]
  %s3 = inlined_call_operand.vmem [shape: f32[128,128], index: 3, kind: input, shape index: {}]
  %s4 = inlined_call_operand.vmem [shape: f32[1,128], index: 4, kind: input, shape index: {}]
  %s5 = inlined_call_operand.vmem [shape: f32[128,4], index: 5, kind: input, shape index: {}]
  %s6 = inlined_call_operand.vmem [shape: f32[1,4], index: 6, kind: input, shape index: {}]
  %s7 = inlined_call_operand.vmem [shape: f32[48,4], index: 7, kind: output, shape index: {}]
  %s8 = sld [smem:[#allocation0]]
  $region61: #{mlp_forward.1} parent=0
    _
  %s10 = ssub.s32 1, %s8
  %s11 = scalar_select 0, %s10, %s8
  loop: start=0, step=1, limit=5
  $region2: #{mlp_forward.1} parent=0 // loop_pre_header
    _
  $region3: #{mlp_forward.1} parent=0 // loop_header
    %s13 = sphi 0, %s17
    %p14 = scmp.ge.s32.totalorder %s13, 5
    %s23 = sphi 0, %s25
    %s26 = sphi 0, %s23
    %s27 = sphi 0, %s26
    %s43 = sphi 0, %s27
    %s47 = sphi 0, %s47
    %s49 = sphi 0, %s47
    %s50 = sphi 0, %s49
    %s64 = sphi 0, %s50
    %s68 = sphi 0, %s68
    %s70 = sphi 0, %s68
    %s71 = sphi 0, %s70
    %s85 = sphi 0, %s71
    %s89 = sphi 0, %s89
    %s91 = sphi 0, %s89
    %s92 = sphi 0, %s91
    %s106 = sphi 0, %s92
    %s110 = sphi 0, %s110
    %s112 = sphi 0, %s110
    %s113 = sphi 0, %s112
    %s127 = sphi 0, %s113
    %s131 = sphi 0, %s131
    %s133 = sphi 0, %s131
    %s134 = sphi 0, %s133
    %s148 = sphi 0, %s134
    %s152 = sphi 0, %s152
    %s154 = sphi 0, %s152
    %s155 = sphi 0, %s154
    %s169 = sphi 0, %s155
    %s175 = sphi 0, %s177
    %s178 = sphi 0, %s175
    %s179 = sphi 0, %s178
    %s195 = sphi 0, %s179
  $region4: #{mlp_forward.1} parent=0 // loop_header_branch
    %16 = sbr.rel (%p14) target = $region8
  $region5: #{mlp_forward.1} parent=0 // loop_body
    %s18 = ssub.s32 %s13, 1
    %s19 = ssub.s32 %s13, 2
    %s20 = sadd.s32 %s13, 1
    %s21 = ssub.s32 %s13, %s20
    %p22 = scmp.eq.s32.totalorder %s21, 0
    %s24 = sadd.s32 %s23, 1
    %s25 = scalar_select %p22, %s23, %s24
    %p28 = pneg %p22
    %p29 = scmp.eq.s32.totalorder %s13, 2
    %p30 = por %p28, %p29
    %p31 = scmp.ne.s32.totalorder %s23, %s26
    %p32 = scmp.eq.s32.totalorder %s13, 0
    %p33 = por %p31, %p32
    %p34 = scmp.ne.s32.totalorder %s23, %s26
    %p35 = scmp.eq.s32.totalorder %s18, 2
    %p36 = por %p34, %p35
    %p37 = scmp.ne.s32.totalorder %s26, %s27
    %p38 = scmp.eq.s32.totalorder %s18, 0
    %p39 = por %p37, %p38
    %p40 = scmp.ne.s32.totalorder %s26, %s27
    %p41 = scmp.eq.s32.totalorder %s19, 2
    %p42 = por %p40, %p41
    %p44 = scmp.ne.s32.totalorder %s27, %s43
    %p45 = scmp.eq.s32.totalorder %s19, 0
    %p46 = por %p44, %p45
    %s48 = sadd.s32 %s47, 1
    %p51 = scmp.eq.s32.totalorder %s13, 2
    %p52 = scmp.ne.s32.totalorder %s47, %s49
    %p53 = scmp.eq.s32.totalorder %s13, 0
    %p54 = por %p52, %p53
    %p55 = scmp.ne.s32.totalorder %s47, %s49
    %p56 = scmp.eq.s32.totalorder %s18, 2
    %p57 = por %p55, %p56
    %p58 = scmp.ne.s32.totalorder %s49, %s50
    %p59 = scmp.eq.s32.totalorder %s18, 0
    %p60 = por %p58, %p59
    %p61 = scmp.ne.s32.totalorder %s49, %s50
    %p62 = scmp.eq.s32.totalorder %s19, 2
    %p63 = por %p61, %p62
    %p65 = scmp.ne.s32.totalorder %s50, %s64
    %p66 = scmp.eq.s32.totalorder %s19, 0
    %p67 = por %p65, %p66
    %s69 = sadd.s32 %s68, 1
    %p72 = scmp.eq.s32.totalorder %s13, 2
    %p73 = scmp.ne.s32.totalorder %s68, %s70
    %p74 = scmp.eq.s32.totalorder %s13, 0
    %p75 = por %p73, %p74
    %p76 = scmp.ne.s32.totalorder %s68, %s70
    %p77 = scmp.eq.s32.totalorder %s18, 2
    %p78 = por %p76, %p77
    %p79 = scmp.ne.s32.totalorder %s70, %s71
    %p80 = scmp.eq.s32.totalorder %s18, 0
    %p81 = por %p79, %p80
    %p82 = scmp.ne.s32.totalorder %s70, %s71
    %p83 = scmp.eq.s32.totalorder %s19, 2
    %p84 = por %p82, %p83
    %p86 = scmp.ne.s32.totalorder %s71, %s85
    %p87 = scmp.eq.s32.totalorder %s19, 0
    %p88 = por %p86, %p87
    %s90 = sadd.s32 %s89, 1
    %p93 = scmp.eq.s32.totalorder %s13, 2
    %p94 = scmp.ne.s32.totalorder %s89, %s91
    %p95 = scmp.eq.s32.totalorder %s13, 0
    %p96 = por %p94, %p95
    %p97 = scmp.ne.s32.totalorder %s89, %s91
    %p98 = scmp.eq.s32.totalorder %s18, 2
    %p99 = por %p97, %p98
    %p100 = scmp.ne.s32.totalorder %s91, %s92
    %p101 = scmp.eq.s32.totalorder %s18, 0
    %p102 = por %p100, %p101
    %p103 = scmp.ne.s32.totalorder %s91, %s92
    %p104 = scmp.eq.s32.totalorder %s19, 2
    %p105 = por %p103, %p104
    %p107 = scmp.ne.s32.totalorder %s92, %s106
    %p108 = scmp.eq.s32.totalorder %s19, 0
    %p109 = por %p107, %p108
    %s111 = sadd.s32 %s110, 1
    %p114 = scmp.eq.s32.totalorder %s13, 2
    %p115 = scmp.ne.s32.totalorder %s110, %s112
    %p116 = scmp.eq.s32.totalorder %s13, 0
    %p117 = por %p115, %p116
    %p118 = scmp.ne.s32.totalorder %s110, %s112
    %p119 = scmp.eq.s32.totalorder %s18, 2
    %p120 = por %p118, %p119
    %p121 = scmp.ne.s32.totalorder %s112, %s113
    %p122 = scmp.eq.s32.totalorder %s18, 0
    %p123 = por %p121, %p122
    %p124 = scmp.ne.s32.totalorder %s112, %s113
    %p125 = scmp.eq.s32.totalorder %s19, 2
    %p126 = por %p124, %p125
    %p128 = scmp.ne.s32.totalorder %s113, %s127
    %p129 = scmp.eq.s32.totalorder %s19, 0
    %p130 = por %p128, %p129
    %s132 = sadd.s32 %s131, 1
    %p135 = scmp.eq.s32.totalorder %s13, 2
    %p136 = scmp.ne.s32.totalorder %s131, %s133
    %p137 = scmp.eq.s32.totalorder %s13, 0
    %p138 = por %p136, %p137
    %p139 = scmp.ne.s32.totalorder %s131, %s133
    %p140 = scmp.eq.s32.totalorder %s18, 2
    %p141 = por %p139, %p140
    %p142 = scmp.ne.s32.totalorder %s133, %s134
    %p143 = scmp.eq.s32.totalorder %s18, 0
    %p144 = por %p142, %p143
    %p145 = scmp.ne.s32.totalorder %s133, %s134
    %p146 = scmp.eq.s32.totalorder %s19, 2
    %p147 = por %p145, %p146
    %p149 = scmp.ne.s32.totalorder %s134, %s148
    %p150 = scmp.eq.s32.totalorder %s19, 0
    %p151 = por %p149, %p150
    %s153 = sadd.s32 %s152, 1
    %p156 = scmp.eq.s32.totalorder %s13, 2
    %p157 = scmp.ne.s32.totalorder %s152, %s154
    %p158 = scmp.eq.s32.totalorder %s13, 0
    %p159 = por %p157, %p158
    %p160 = scmp.ne.s32.totalorder %s152, %s154
    %p161 = scmp.eq.s32.totalorder %s18, 2
    %p162 = por %p160, %p161
    %p163 = scmp.ne.s32.totalorder %s154, %s155
    %p164 = scmp.eq.s32.totalorder %s18, 0
    %p165 = por %p163, %p164
    %p166 = scmp.ne.s32.totalorder %s154, %s155
    %p167 = scmp.eq.s32.totalorder %s19, 2
    %p168 = por %p166, %p167
    %p170 = scmp.ne.s32.totalorder %s155, %s169
    %p171 = scmp.eq.s32.totalorder %s19, 0
    %p172 = por %p170, %p171
    %s173 = ssub.s32 %s13, %s20
    %p174 = scmp.eq.s32.totalorder %s173, 0
    %s176 = sadd.s32 %s175, 1
    %s177 = scalar_select %p174, %s175, %s176
    %p180 = pneg %p174
    %p181 = scmp.eq.s32.totalorder %s13, 2
    %p182 = por %p180, %p181
    %p183 = scmp.ne.s32.totalorder %s175, %s178
    %p184 = scmp.eq.s32.totalorder %s13, 0
    %p185 = por %p183, %p184
    %p186 = scmp.ne.s32.totalorder %s175, %s178
    %p187 = scmp.eq.s32.totalorder %s18, 2
    %p188 = por %p186, %p187
    %p189 = scmp.ne.s32.totalorder %s178, %s179
    %p190 = scmp.eq.s32.totalorder %s18, 0
    %p191 = por %p189, %p190
    %p192 = scmp.ne.s32.totalorder %s178, %s179
    %p193 = scmp.eq.s32.totalorder %s19, 2
    %p194 = por %p192, %p193
    %p196 = scmp.ne.s32.totalorder %s179, %s195
    %p197 = scmp.eq.s32.totalorder %s19, 0
    %p198 = por %p196, %p197
    %p199 = scmp.le.s32.totalorder 1, %s13
    %p200 = scmp.lt.s32.totalorder %s13, 4
    %p201 = pnand %p199, %p200
    %p202 = pneg %p201
    // Predicated region
    $region9: #{mlp_forward.1} parent=5 // pred_check
      _
    $region10: #{mlp_forward.1} parent=5 // pred_check_branch
      %204 = sbr.rel (%p201) target = $region12
    $region11: #{mlp_forward.1} parent=5 // pred_region
      %s205 = ssub.s32 %s13, 1
      // Predicated region
      $region13: #{mlp_forward.1} parent=11 // pred_check
        %p206 = pneg %p60
      $region14: #{mlp_forward.1} parent=11 // pred_check_branch
        %208 = sbr.rel (%p206) target = $region16
      $region15: #{mlp_forward.1} parent=11 // pred_region
        _
      $region16: #{mlp_forward.1} parent=11 // pred_fallthru
        _
      // Predicated region
      $region17: #{mlp_forward.1} parent=11 // pred_check
        %p209 = pneg %p81
      $region18: #{mlp_forward.1} parent=11 // pred_check_branch
        %211 = sbr.rel (%p209) target = $region20
      $region19: #{mlp_forward.1} parent=11 // pred_region
        _
      $region20: #{mlp_forward.1} parent=11 // pred_fallthru
        _
      // Predicated region
      $region21: #{mlp_forward.1} parent=11 // pred_check
        %p212 = pneg %p102
      $region22: #{mlp_forward.1} parent=11 // pred_check_branch
        %214 = sbr.rel (%p212) target = $region24
      $region23: #{mlp_forward.1} parent=11 // pred_region
        _
      $region24: #{mlp_forward.1} parent=11 // pred_fallthru
        _
      // Predicated region
      $region25: #{mlp_forward.1} parent=11 // pred_check
        %p215 = pneg %p123
      $region26: #{mlp_forward.1} parent=11 // pred_check_branch
        %217 = sbr.rel (%p215) target = $region28
      $region27: #{mlp_forward.1} parent=11 // pred_region
        _
      $region28: #{mlp_forward.1} parent=11 // pred_fallthru
        _
      // Predicated region
      $region29: #{mlp_forward.1} parent=11 // pred_check
        %p218 = pneg %p144
      $region30: #{mlp_forward.1} parent=11 // pred_check_branch
        %220 = sbr.rel (%p218) target = $region32
      $region31: #{mlp_forward.1} parent=11 // pred_region
        _
      $region32: #{mlp_forward.1} parent=11 // pred_fallthru
        _
      // Predicated region
      $region33: #{mlp_forward.1} parent=11 // pred_check
        %p221 = pneg %p165
      $region34: #{mlp_forward.1} parent=11 // pred_check_branch
        %223 = sbr.rel (%p221) target = $region36
      $region35: #{mlp_forward.1} parent=11 // pred_region
        _
      $region36: #{mlp_forward.1} parent=11 // pred_fallthru
        _
    $region12: #{mlp_forward.1} parent=5 // pred_fallthru
      _
    %p224 = scmp.lt.s32.totalorder %s13, 3
    // Predicated region
    $region37: #{mlp_forward.1} parent=5 // pred_check
      %p225 = pneg %p224
    $region38: #{mlp_forward.1} parent=5 // pred_check_branch
      %227 = sbr.rel (%p225) target = $region40
    $region39: #{mlp_forward.1} parent=5 // pred_region
      // Predicated region
      $region41: #{mlp_forward.1} parent=39 // pred_check
        %p228 = pneg %p33
      $region42: #{mlp_forward.1} parent=39 // pred_check_branch
        %230 = sbr.rel (%p228) target = $region44
      $region43: #{mlp_forward.1} parent=39 // pred_region
        %s231 = smul.u32 2, %s13
        %p232 = scmp.lt.s32.totalorder %s231, 5
        %s233 = scalar_select %p232, %s231, 5
        %s234 = smul.addr %s233, 8
        %s235 = scalar_lea.vmem %s0, %s234
        %s236 = smul.u32 2, %s13
      $region44: #{mlp_forward.1} parent=39 // pred_fallthru
        _
    $region40: #{mlp_forward.1} parent=5 // pred_fallthru
      _
    %p237 = scmp.le.s32.totalorder 1, %s13
    %p238 = scmp.lt.s32.totalorder %s13, 4
    %p239 = pnand %p237, %p238
    %p240 = pneg %p239
    // Predicated region
    $region45: #{mlp_forward.1} parent=5 // pred_check
      _
    $region46: #{mlp_forward.1} parent=5 // pred_check_branch
      %242 = sbr.rel (%p239) target = $region48
    $region47: #{mlp_forward.1} parent=5 // pred_region
      %s243 = ssub.s32 %s13, 1
      %s244 = smul.u32 2, %s18
      %p245 = scmp.lt.s32.totalorder %s244, 5
      %s246 = scalar_select %p245, %s244, 5
      %s247 = smul.addr %s246, 8
      %s248 = scalar_lea.vmem %s0, %s247
      %p249 = pneg %p39
      %p250 = pneg %p36
      %p251 = pneg %p60
      %p252 = pneg %p57
      %p253 = pneg %p81
      %p254 = pneg %p78
      %p255 = pneg %p102
      %p256 = pneg %p99
      %p257 = pneg %p123
      %p258 = pneg %p120
      %p259 = pneg %p144
      %p260 = pneg %p141
      %p261 = pneg %p165
      %p262 = pneg %p162
      %p263 = pneg %p191
      %p264 = pneg %p188
      %s265 = smul.u32 2, %s18
      %p266 = scmp.lt.s32.totalorder %s265, 5
      %s267 = scalar_select %p266, %s265, 5
      %s268 = smul.addr %s267, 8
      %s269 = scalar_lea.vmem %s7, %s268
      %s270 = smul.u32 2, %s18
      %p271 = scmp.lt.s32.totalorder %s270, 5
      %s272 = scalar_select %p271, %s270, 5
      %s273 = smul.addr %s272, 8
      %s274 = scalar_lea.vmem %s0, %s273
      %s275 = smul.u32 2, %s18
      %s276 = smul.u32 2, %s18
      %p277 = scmp.lt.s32.totalorder %s276, 5
      %s278 = scalar_select %p277, %s276, 5
      %s279 = smul.addr %s278, 8
      %s280 = scalar_lea.vmem %s7, %s279
      %s281 = smul.u32 2, %s18
      %v282 = vld [vmem:[%s274] sm:$0xff]
      %v283 = vld [vmem:[%s274 + $0x8] sm:$0xff]
      %v284 = vld [vmem:[%s1] sm:$0x3f]
      %v285 = vld [vmem:[%s2] sm:$0x1]
      %v287 = vperm.slane %v285, 0
      %vm289 = vcmask 48128
      %v291 = vsel %vm289, %v282, 0
      %v294 = vsel %vm289, %v283, 0
      %vm296 = vcmask 1045504
      %v298 = vsel %vm296, %v284, 0
      %300 = vmatpush.msra.mxu0 0.0
      %301 = vmatpush.msra.mxu0 0.0
      %302 = vmatpush.msra.mxu0 0.0
      %303 = vmatpush.msra.mxu0 0.0
      %304 = vmatpush.msra.mxu0 0.0
      %305 = vmatpush.msra.mxu0 0.0
      %306 = vmatpush.msra.mxu0 0.0
      %307 = vmatpush.msra.mxu0 0.0
      %308 = vmatpush.msra.mxu0 0.0
      %309 = vmatpush.msra.mxu0 0.0
      %310 = vmatpush.msra.mxu0 0.0
      %311 = vmatpush.msra.mxu0 0.0
      %312 = vmatpush.msra.mxu0 0.0
      %313 = vmatpush.msra.mxu0 0.0
      %314 = vmatpush.msra.mxu0 0.0
      %315 = vmatpush.msra.mxu0 %v298
      %316 = vmatmul.f32.gmra.mxu0 %v291
      %v317 = vpop.f32.mrf.mxu0
      %v318 = vadd.f32 %v287, %v317
      %319 = vmatmul.f32.gmra.mxu0 %v294
      %v320 = vpop.f32.mrf.mxu0
      %v321 = vadd.f32 %v287, %v320
      %322 = vdwg.mxu0
      %v323 = vld [vmem:[%s3] sm:$0xff]
      %v324 = vld [vmem:[%s3 + $0x8] sm:$0xff]
      %v325 = vld [vmem:[%s3 + $0x10] sm:$0xff]
      %v326 = vld [vmem:[%s3 + $0x18] sm:$0xff]
      %v327 = vld [vmem:[%s3 + $0x20] sm:$0xff]
      %v328 = vld [vmem:[%s3 + $0x28] sm:$0xff]
      %v329 = vld [vmem:[%s3 + $0x30] sm:$0xff]
      %v330 = vld [vmem:[%s3 + $0x38] sm:$0xff]
      %v331 = vld [vmem:[%s3 + $0x40] sm:$0xff]
      %v332 = vld [vmem:[%s3 + $0x48] sm:$0xff]
      %v333 = vld [vmem:[%s3 + $0x50] sm:$0xff]
      %v334 = vld [vmem:[%s3 + $0x58] sm:$0xff]
      %v335 = vld [vmem:[%s3 + $0x60] sm:$0xff]
      %v336 = vld [vmem:[%s3 + $0x68] sm:$0xff]
      %v337 = vld [vmem:[%s3 + $0x70] sm:$0xff]
      %v338 = vld [vmem:[%s3 + $0x78] sm:$0xff]
      %v339 = vld [vmem:[%s4] sm:$0x1]
      %v340 = vmax.f32 %v318, 0.0
      %v341 = vmax.f32 %v321, 0.0
      %v343 = vperm.slane %v339, 0
      %345 = vmatpush.msra.mxu0 %v338
      %346 = vmatpush.msra.mxu0 %v337
      %347 = vmatpush.msra.mxu0 %v336
      %348 = vmatpush.msra.mxu0 %v335
      %349 = vmatpush.msra.mxu0 %v334
      %350 = vmatpush.msra.mxu0 %v333
      %351 = vmatpush.msra.mxu0 %v332
      %352 = vmatpush.msra.mxu0 %v331
      %353 = vmatpush.msra.mxu0 %v330
      %354 = vmatpush.msra.mxu0 %v329
      %355 = vmatpush.msra.mxu0 %v328
      %356 = vmatpush.msra.mxu0 %v327
      %357 = vmatpush.msra.mxu0 %v326
      %358 = vmatpush.msra.mxu0 %v325
      %359 = vmatpush.msra.mxu0 %v324
      %360 = vmatpush.msra.mxu0 %v323
      %361 = vmatmul.f32.gmra.mxu0 %v340
      %v362 = vpop.f32.mrf.mxu0
      %v363 = vadd.f32 %v343, %v362
      %364 = vmatmul.f32.gmra.mxu0 %v341
      %v365 = vpop.f32.mrf.mxu0
      %v366 = vadd.f32 %v343, %v365
      %367 = vdwg.mxu0
      %v368 = vld [vmem:[%s5] sm:$0xff]
      %v369 = vld [vmem:[%s5 + $0x8] sm:$0xff]
      %v370 = vld [vmem:[%s5 + $0x10] sm:$0xff]
      %v371 = vld [vmem:[%s5 + $0x18] sm:$0xff]
      %v372 = vld [vmem:[%s5 + $0x20] sm:$0xff]
      %v373 = vld [vmem:[%s5 + $0x28] sm:$0xff]
      %v374 = vld [vmem:[%s5 + $0x30] sm:$0xff]
      %v375 = vld [vmem:[%s5 + $0x38] sm:$0xff]
      %v376 = vld [vmem:[%s5 + $0x40] sm:$0xff]
      %v377 = vld [vmem:[%s5 + $0x48] sm:$0xff]
      %v378 = vld [vmem:[%s5 + $0x50] sm:$0xff]
      %v379 = vld [vmem:[%s5 + $0x58] sm:$0xff]
      %v380 = vld [vmem:[%s5 + $0x60] sm:$0xff]
      %v381 = vld [vmem:[%s5 + $0x68] sm:$0xff]
      %v382 = vld [vmem:[%s5 + $0x70] sm:$0xff]
      %v383 = vld [vmem:[%s5 + $0x78] sm:$0xff]
      %v384 = vld [vmem:[%s6] sm:$0x1]
      %v385 = vmax.f32 %v363, 0.0
      %v386 = vmax.f32 %v366, 0.0
      %v388 = vperm.slane %v384, 0
      %390 = vmatpush.msra.mxu0 %v383
      %391 = vmatpush.msra.mxu0 %v382
      %392 = vmatpush.msra.mxu0 %v381
      %393 = vmatpush.msra.mxu0 %v380
      %394 = vmatpush.msra.mxu0 %v379
      %395 = vmatpush.msra.mxu0 %v378
      %396 = vmatpush.msra.mxu0 %v377
      %397 = vmatpush.msra.mxu0 %v376
      %398 = vmatpush.msra.mxu0 %v375
      %399 = vmatpush.msra.mxu0 %v374
      %400 = vmatpush.msra.mxu0 %v373
      %401 = vmatpush.msra.mxu0 %v372
      %402 = vmatpush.msra.mxu0 %v371
      %403 = vmatpush.msra.mxu0 %v370
      %404 = vmatpush.msra.mxu0 %v369
      %405 = vmatpush.msra.mxu0 %v368
      %406 = vmatmul.f32.gmra.mxu0 %v385
      %v407 = vpop.f32.mrf.mxu0
      %v408 = vadd.f32 %v388, %v407
      %409 = vmatmul.f32.gmra.mxu0 %v386
      %v410 = vpop.f32.mrf.mxu0
      %v411 = vadd.f32 %v388, %v410
      %412 = vdwg.mxu0
      %vm413 = vcmask 31744
      %v414 = vsel %vm413, %v408, -inf
      %415 = vmax.xlane.f32.xlu0 %v414
      %v416 = vpop.xlane.xlu0 %415
      %v417 = vsel %vm413, %v411, -inf
      %418 = vmax.xlane.f32.xlu0 %v417
      %v419 = vpop.xlane.xlu0 %418
      %v420 = vsub.f32 %v408, %v416
      %v421 = vsub.f32 %v411, %v419
      %v422 = vmul.f32 %v420, 1.442695
      %v423 = vpow.pop %v422
      %v424 = vmul.f32 %v421, 1.442695
      %v425 = vpow.pop %v424
      %v426 = vsel %vm413, %v423, 0.0
      %427 = vadd.xlane.f32.xlu0 %v426
      %v428 = vpop.xlane.xlu0 %427
      %v429 = vsel %vm413, %v425, 0.0
      %430 = vadd.xlane.f32.xlu0 %v429
      %v431 = vpop.xlane.xlu0 %430
      %v432 = vrcp.pop %v428
      %v433 = vmul.f32 %v428, %v432
      %v434 = vsub.f32 1.0, %v433
      %v435 = vmul.f32 %v432, %v434
      %v436 = vadd.f32 %v432, %v435
      %vm437 = vweird.f32 %v428
      %vm438 = vweird.f32 %v432
      %vm439 = vmor %vm437, %vm438
      %v440 = vsel %vm439, %v432, %v436
      %v441 = vand.u32 2147483647, %v428
      %vm442 = vcmp.eq.f32.partialorder %v441, 8.507059e+37
      %v443 = vand.u32 %v428, 2147483648
      %v444 = vor.u32 1.1754944e-38, %v443
      %v445 = vsel %vm442, %v444, %v440
      %v446 = vmul.f32 %v423, %v445
      %v447 = vrcp.pop %v431
      %v448 = vmul.f32 %v431, %v447
      %v449 = vsub.f32 1.0, %v448
      %v450 = vmul.f32 %v447, %v449
      %v451 = vadd.f32 %v447, %v450
      %vm452 = vweird.f32 %v431
      %vm453 = vweird.f32 %v447
      %vm454 = vmor %vm452, %vm453
      %v455 = vsel %vm454, %v447, %v451
      %v456 = vand.u32 2147483647, %v431
      %vm457 = vcmp.eq.f32.partialorder %v456, 8.507059e+37
      %v458 = vand.u32 %v431, 2147483648
      %v459 = vor.u32 1.1754944e-38, %v458
      %v460 = vsel %vm457, %v459, %v455
      %v461 = vmul.f32 %v425, %v460
      %462 = vst.msk [vmem:[%s280] sm:$0xff] %vm413, %v446
      %463 = vst.msk [vmem:[%s280 + $0x8] sm:$0xff] %vm413, %v461
      %s464 = smul.u32 2, %s18
      %p465 = scmp.lt.s32.totalorder %s464, 5
      %s466 = scalar_select %p465, %s464, 5
      %s467 = smul.addr %s466, 8
      %s468 = scalar_lea.vmem %s7, %s467
      // Predicated region
      $region49: #{mlp_forward.1} parent=47 // pred_check
        %p469 = pneg %p188
      $region50: #{mlp_forward.1} parent=47 // pred_check_branch
        %471 = sbr.rel (%p469) target = $region52
      $region51: #{mlp_forward.1} parent=47 // pred_region
        %s472 = smul.u32 2, %s18
      $region52: #{mlp_forward.1} parent=47 // pred_fallthru
        _
    $region48: #{mlp_forward.1} parent=5 // pred_fallthru
      _
    %p473 = scmp.le.s32.totalorder 2, %s13
    // Predicated region
    $region53: #{mlp_forward.1} parent=5 // pred_check
      %p474 = pneg %p473
    $region54: #{mlp_forward.1} parent=5 // pred_check_branch
      %476 = sbr.rel (%p474) target = $region56
    $region55: #{mlp_forward.1} parent=5 // pred_region
      %s477 = ssub.s32 %s13, 2
      // Predicated region
      $region57: #{mlp_forward.1} parent=55 // pred_check
        %p478 = pneg %p194
      $region58: #{mlp_forward.1} parent=55 // pred_check_branch
        %480 = sbr.rel (%p478) target = $region60
      $region59: #{mlp_forward.1} parent=55 // pred_region
        %s481 = smul.u32 2, %s19
        %p482 = scmp.lt.s32.totalorder %s481, 5
        %s483 = scalar_select %p482, %s481, 5
        %s484 = smul.addr %s483, 8
        %s485 = scalar_lea.vmem %s7, %s484
      $region60: #{mlp_forward.1} parent=55 // pred_fallthru
        _
    $region56: #{mlp_forward.1} parent=5 // pred_fallthru
      _
  $region6: #{mlp_forward.1} parent=0 // loop_footer
    %s17 = sadd.s32 1, %s13
  $region7: #{mlp_forward.1} parent=0 // loop_footer_branch
    %12 = sbr.rel target = $region3
  $region8: #{mlp_forward.1} parent=0 // loop_exit
    _

</llo_original>
